<compile_context>
chip_gen: v6e
topology: v6e:2x2x1
jax: 0.10.0
libtpu: 0.0.40
codegen_flags: <defaults>
</compile_context>

<pallas_src>
import math
import functools

import jax
import jax.numpy as jnp
from jax import lax
from jax.experimental import pallas as pl
from jax.experimental.pallas import tpu as pltpu


# --------------------------- parameter packing ------------------------------

def _choose_head_group(num_heads, head_dim):
    """Smallest head-group size whose lane width is a multiple of 128 (max
    grid parallelism); falls back to a single group if none exists."""
    for g in range(1, num_heads + 1):
        if num_heads % g == 0 and (g * head_dim) % 128 == 0:
            return g
    return num_heads


def pack_qkv_params(params, num_attention_heads, compute_dtype=jnp.bfloat16):
    """Pack Wq/Wk/Wv (+biases) into per-head-group blocks, folding the
    1/sqrt(head_dim) scale into the Q columns. Call ONCE at param-load time."""
    H = params["wq"].shape[0]
    nH = num_attention_heads
    if H % nH != 0:
        raise ValueError(f"hidden size {H} not a multiple of heads {nH}")
    Dh = H // nH
    Gh = _choose_head_group(nH, Dh)          # heads per group
    G = nH // Gh                             # number of groups
    Gw = Gh * Dh                             # group lane width

    scale = 1.0 / math.sqrt(Dh)
    wq = params["wq"] * scale
    bq = params["bq"] * scale
    wk, bk = params["wk"], params["bk"]
    wv, bv = params["wv"], params["bv"]

    w_blocks, b_blocks = [], []
    for g in range(G):
        cols = slice(g * Gw, (g + 1) * Gw)
        w_blocks += [wq[:, cols], wk[:, cols], wv[:, cols]]
        b_blocks += [bq[cols], bk[cols], bv[cols]]
    w_qkv = jnp.concatenate(w_blocks, axis=1).astype(compute_dtype)          # (H, 3H)
    b_qkv = jnp.concatenate(b_blocks).reshape(1, 3 * H).astype(jnp.float32)  # (1, 3H)

    return {
        "w_qkv": w_qkv, "b_qkv": b_qkv,
        "num_heads": nH, "head_dim": Dh, "heads_per_group": Gh,
        "compute_dtype": compute_dtype,
    }


def _normalize_mask(attention_mask, B, S):
    """Accept (B,1,1,S), (B,1,S,S), (B,1,S) or (B,S,S) additive masks and
    return a (B, Mq, S) f32 array with Mq in {1, S}."""
    m = jnp.asarray(attention_mask, dtype=jnp.float32)
    if m.ndim == 4:
        if m.shape[1] != 1:
            raise ValueError("per-head attention masks are not supported")
        m = m[:, 0]
    if m.ndim != 3 or m.shape[0] != B or m.shape[-1] != S or m.shape[1] not in (1, S):
        raise ValueError(f"unsupported attention_mask shape {attention_mask.shape}")
    return m


# ----------------------- fused QKV-projection + attention kernel ------------

def _fused_attn_kernel(x_ref, w_ref, b_ref, mask_ref, o_ref, *,
                       heads_per_group, head_dim, compute_dtype):
    """One (batch, head-group) tile per grid step.

    x_ref:    (1, S, H)      activations
    w_ref:    (H, 3*Gw)      packed [Wq_g | Wk_g | Wv_g] (compute_dtype,
                             scale already folded into the Q columns)
    b_ref:    (1, 3*Gw)      packed biases (f32, Q part pre-scaled)
    mask_ref: (1, Mq, S)     additive attention mask, Mq in {1, S}
    o_ref:    (1, S, Gw)     context output for this head group
    """
    Gw = heads_per_group * head_dim
    S = x_ref.shape[1]

    # Fused Q/K/V projection for this head group: one bf16 MXU matmul with
    # f32 accumulation, bias add in f32, then ONE cast to the compute dtype.
    x = x_ref[0].astype(compute_dtype)                               # (S, H)
    qkv = jnp.dot(x, w_ref[...], preferred_element_type=jnp.float32)  # (S, 3Gw)
    qkv = (qkv + b_ref[...]).astype(compute_dtype)

    # Lane-aligned group slices (offsets are multiples of Gw).
    q_g = qkv[:, :Gw]
    k_g = qkv[:, Gw:2 * Gw]
    v_g = qkv[:, 2 * Gw:3 * Gw]

    # Hoist the mask broadcast out of the head loop.
    mask = mask_ref[0].astype(jnp.float32)                           # (Mq, S)
    if mask.shape[0] == 1:
        mask = jnp.broadcast_to(mask, (S, S))

    for h in range(heads_per_group):
        sl = slice(h * head_dim, (h + 1) * head_dim)

        # scores = (q * 1/sqrt(Dh)) @ k^T; scale already folded into W_q.
        # Contract on the last dims so K is consumed in its stored layout.
        scores = lax.dot_general(
            q_g[:, sl], k_g[:, sl],
            dimension_numbers=(((1,), (1,)), ((), ())),
            preferred_element_type=jnp.float32)                      # (S, S)
        scores = scores + mask

        # Numerically stable softmax with DEFERRED normalization: run the PV
        # matmul on the un-normalized exp and scale the (S, Dh) context
        # afterwards (reciprocal on the EUP slot).
        scores = scores - jnp.max(scores, axis=-1, keepdims=True)
        expd = jnp.exp(scores)
        denom = jnp.sum(expd, axis=-1, keepdims=True)                # (S, 1)
        ctx = jnp.dot(expd.astype(compute_dtype), v_g[:, sl],
                      preferred_element_type=jnp.float32)            # (S, Dh)
        ctx = ctx * pl.reciprocal(denom, approx=True)

        # Direct per-head store into the output block (no concatenate).
        o_ref[0, :, sl] = ctx.astype(o_ref.dtype)


# ----------------------------- module wrapper -------------------------------

def bert_self_attention_packed(hidden_states, attention_mask, packed):
    """Forward pass matching BertSelfAttention.forward (history_states=None,
    dropout in eval mode), using pre-packed parameters."""
    B, S, H = hidden_states.shape
    nH = packed["num_heads"]
    Dh = packed["head_dim"]
    Gh = packed["heads_per_group"]
    G = nH // Gh
    Gw = Gh * Dh
    if nH * Dh != H:
        raise ValueError("packed params do not match hidden size")

    mask = _normalize_mask(attention_mask, B, S)
    Mq = mask.shape[1]

    kernel = functools.partial(
        _fused_attn_kernel,
        heads_per_group=Gh, head_dim=Dh,
        compute_dtype=packed["compute_dtype"])

    return pl.pallas_call(
        kernel,
        out_shape=jax.ShapeDtypeStruct((B, S, H), hidden_states.dtype),
        grid_spec=pltpu.PrefetchScalarGridSpec(
            num_scalar_prefetch=0,
            grid=(B, G),
            in_specs=[
                # Activations: constant across the (inner) group axis -> DMA'd
                # once per batch element, stays VMEM-resident across groups.
                pl.BlockSpec((1, S, H), lambda b, g: (b, 0, 0)),
                # Per-group packed weights / biases.
                pl.BlockSpec((H, 3 * Gw), lambda b, g: (0, g)),
                pl.BlockSpec((1, 3 * Gw), lambda b, g: (0, g)),
                # Additive mask (broadcast over heads; Mq in {1, S}).
                pl.BlockSpec((1, Mq, S), lambda b, g: (b, 0, 0)),
            ],
            out_specs=pl.BlockSpec((1, S, Gw), lambda b, g: (b, 0, g)),
        ),
        compiler_params=pltpu.CompilerParams(
            dimension_semantics=("parallel", "parallel"),
            vmem_limit_bytes=40 * 1024 * 1024,   # leaves headroom on v7x (64 MiB)
        ),
    )(hidden_states, packed["w_qkv"], packed["b_qkv"], mask)


def bert_self_attention(hidden_states, attention_mask, params,
                        num_attention_heads, compute_dtype=jnp.bfloat16):
    """Convenience wrapper: packs params then runs the kernel. In an inference
    loop, call pack_qkv_params() once and use bert_self_attention_packed()."""
    packed = pack_qkv_params(params, num_attention_heads, compute_dtype)
    return bert_self_attention_packed(hidden_states, attention_mask, packed)


# ----------------------------- pure-JAX reference ---------------------------

def _reference(hidden_states, attention_mask, params, num_attention_heads):
    B, S, H = hidden_states.shape
    nH = num_attention_heads
    Dh = H // nH
    q = hidden_states @ params["wq"] + params["bq"]
    k = hidden_states @ params["wk"] + params["bk"]
    v = hidden_states @ params["wv"] + params["bv"]
    split = lambda x: jnp.transpose(x.reshape(B, S, nH, Dh), (0, 2, 1, 3))
    q, k, v = split(q), split(k), split(v)
    scores = jnp.einsum("bhqd,bhkd->bhqk", q / math.sqrt(Dh), k)
    scores = scores + attention_mask
    probs = jax.nn.softmax(scores, axis=-1)
    ctx = jnp.einsum("bhqk,bhkd->bhqd", probs, v)
    return jnp.transpose(ctx, (0, 2, 1, 3)).reshape(B, S, H)


if __name__ == "__main__":
    key = jax.random.PRNGKey(0)

    def make_params(key, H):
        kq, kk, kv, kbq, kbk, kbv = jax.random.split(key, 6)
        init = lambda k, shape: 0.02 * jax.random.normal(k, shape, dtype=jnp.float32)
        return {
            "wq": init(kq, (H, H)), "bq": init(kbq, (H,)),
            "wk": init(kk, (H, H)), "bk": init(kbk, (H,)),
            "wv": init(kv, (H, H)), "bv": init(kbv, (H,)),
        }

    # ---- Case 1: single head group, broadcast (B,1,1,S) padding mask -------
    B, S, H, nH = 2, 8, 32, 4
    k1, k2, key = jax.random.split(key, 3)
    hidden1 = jax.random.normal(k1, (B, S, H), dtype=jnp.float32)
    params1 = make_params(k2, H)
    mask1 = jnp.zeros((B, 1, 1, S), dtype=jnp.float32)
    mask1 = mask1.at[1, 0, 0, -2:].set(-10000.0)

    packed1 = pack_qkv_params(params1, nH)          # pack once (param-load time)
    out1 = jax.block_until_ready(
        bert_self_attention_packed(hidden1, mask1, packed1))
    ref1 = _reference(hidden1, mask1, params1, nH)
    assert out1.shape == (B, S, H)
    assert jnp.allclose(out1, ref1, atol=2e-2, rtol=2e-2), (
        float(jnp.max(jnp.abs(out1 - ref1))))

    # ---- Case 2: multiple head groups, UniLM-style (B,1,S,S) seq2seq mask --
    B2, S2, H2, nH2 = 2, 16, 256, 2
    k3, k4, key = jax.random.split(key, 3)
    hidden2 = jax.random.normal(k3, (B2, S2, H2), dtype=jnp.float32)
    params2 = make_params(k4, H2)
    causal = jnp.tril(jnp.ones((S2, S2), dtype=jnp.float32))
    mask2 = ((1.0 - causal) * -10000.0)[None, None]                 # (1,1,S,S)
    mask2 = jnp.broadcast_to(mask2, (B2, 1, S2, S2))

    packed2 = pack_qkv_params(params2, nH2)
    out2 = jax.block_until_ready(
        bert_self_attention_packed(hidden2, mask2, packed2))
    ref2 = _reference(hidden2, mask2, params2, nH2)
    assert out2.shape == (B2, S2, H2)
    assert jnp.allclose(out2, ref2, atol=2e-2, rtol=2e-2), (
        float(jnp.max(jnp.abs(out2 - ref2))))

    print("KERNEL_OK")
</pallas_src>

<mosaic_0001>
module attributes {stable_mosaic.version = 11 : i64} {
  func.func @_fused_attn_kernel(%arg0: i32, %arg1: i32, %arg2: memref<1x8x32xf32, #tpu.memory_space<vmem>>, %arg3: memref<32x96xbf16, #tpu.memory_space<vmem>>, %arg4: memref<1x96xf32, #tpu.memory_space<vmem>>, %arg5: memref<1x1x8xf32, #tpu.memory_space<vmem>>, %arg6: memref<1x8x32xf32, #tpu.memory_space<vmem>>) attributes {dimension_semantics = [#tpu.dimension_semantics<parallel>, #tpu.dimension_semantics<parallel>], iteration_bounds = array<i64: 2, 1>, scalar_prefetch = 0 : i64, scratch_operands = 0 : i64, tpu.core_type = #tpu.core_type<tc>, window_params = [{transform_indices = @transform_0, window_bounds = array<i64: 1, 8, 32>}, {transform_indices = @transform_1, window_bounds = array<i64: 32, 96>}, {transform_indices = @transform_2, window_bounds = array<i64: 1, 96>}, {transform_indices = @transform_3, window_bounds = array<i64: 1, 1, 8>}, {transform_indices = @transform_4, window_bounds = array<i64: 1, 8, 32>}]} {
    %c0 = arith.constant 0 : index
    %c0_0 = arith.constant 0 : index
    %c0_1 = arith.constant 0 : index
    %0 = vector.load %arg2[%c0, %c0_0, %c0_1] : memref<1x8x32xf32, #tpu.memory_space<vmem>>, vector<1x8x32xf32>
    %1 = vector.shape_cast %0 : vector<1x8x32xf32> to vector<8x32xf32>
    %2 = arith.truncf %1 : vector<8x32xf32> to vector<8x32xbf16>
    %c0_2 = arith.constant 0 : index
    %c0_3 = arith.constant 0 : index
    %3 = vector.load %arg3[%c0_2, %c0_3] : memref<32x96xbf16, #tpu.memory_space<vmem>>, vector<32x96xbf16>
    %cst = arith.constant dense<0.000000e+00> : vector<8x96xf32>
    %4 = tpu.matmul %2, %3, %cst {dimension_numbers = #tpu.dot_dimension_numbers<[1], [0], [0], [1], [0, 0, 1, 1], [], []>} : vector<8x32xbf16>, vector<32x96xbf16>, vector<8x96xf32> -> vector<8x96xf32>
    %c0_4 = arith.constant 0 : index
    %c0_5 = arith.constant 0 : index
    %5 = vector.load %arg4[%c0_4, %c0_5] : memref<1x96xf32, #tpu.memory_space<vmem>>, vector<1x96xf32>
    %6 = vector.broadcast %5 : vector<1x96xf32> to vector<8x96xf32>
    %7 = arith.addf %4, %6 : vector<8x96xf32>
    %8 = arith.truncf %7 : vector<8x96xf32> to vector<8x96xbf16>
    %9 = vector.extract_strided_slice %8 {offsets = [0, 0], sizes = [8, 32], strides = [1, 1]} : vector<8x96xbf16> to vector<8x32xbf16>
    %10 = vector.extract_strided_slice %8 {offsets = [0, 32], sizes = [8, 32], strides = [1, 1]} : vector<8x96xbf16> to vector<8x32xbf16>
    %11 = vector.extract_strided_slice %8 {offsets = [0, 64], sizes = [8, 32], strides = [1, 1]} : vector<8x96xbf16> to vector<8x32xbf16>
    %c0_6 = arith.constant 0 : index
    %c0_7 = arith.constant 0 : index
    %c0_8 = arith.constant 0 : index
    %12 = vector.load %arg5[%c0_6, %c0_7, %c0_8] : memref<1x1x8xf32, #tpu.memory_space<vmem>>, vector<1x1x8xf32>
    %13 = vector.shape_cast %12 : vector<1x1x8xf32> to vector<1x8xf32>
    %14 = vector.shape_cast %13 : vector<1x8xf32> to vector<1x8xf32>
    %15 = vector.broadcast %14 : vector<1x8xf32> to vector<8x8xf32>
    %16 = vector.extract_strided_slice %9 {offsets = [0, 0], sizes = [8, 8], strides = [1, 1]} : vector<8x32xbf16> to vector<8x8xbf16>
    %17 = vector.extract_strided_slice %10 {offsets = [0, 0], sizes = [8, 8], strides = [1, 1]} : vector<8x32xbf16> to vector<8x8xbf16>
    %cst_9 = arith.constant dense<0.000000e+00> : vector<8x8xf32>
    %18 = tpu.matmul %16, %17, %cst_9 {dimension_numbers = #tpu.dot_dimension_numbers<[1], [1], [0], [0], [0, 0, 1, 0], [], []>} : vector<8x8xbf16>, vector<8x8xbf16>, vector<8x8xf32> -> vector<8x8xf32>
    %19 = arith.addf %18, %15 : vector<8x8xf32>
    %cst_10 = arith.constant dense<0xFF800000> : vector<8xf32>
    %20 = vector.multi_reduction <maximumf>, %19, %cst_10 [1] : vector<8x8xf32> to vector<8xf32>
    %21 = vector.shape_cast %20 : vector<8xf32> to vector<8x1xf32>
    %22 = vector.broadcast %21 : vector<8x1xf32> to vector<8x8xf32>
    %23 = arith.subf %19, %22 : vector<8x8xf32>
    %24 = math.exp %23 : vector<8x8xf32>
    %cst_11 = arith.constant dense<0.000000e+00> : vector<8xf32>
    %25 = vector.multi_reduction <add>, %24, %cst_11 [1] : vector<8x8xf32> to vector<8xf32>
    %26 = vector.shape_cast %25 : vector<8xf32> to vector<8x1xf32>
    %27 = arith.truncf %24 : vector<8x8xf32> to vector<8x8xbf16>
    %28 = vector.extract_strided_slice %11 {offsets = [0, 0], sizes = [8, 8], strides = [1, 1]} : vector<8x32xbf16> to vector<8x8xbf16>
    %cst_12 = arith.constant dense<0.000000e+00> : vector<8x8xf32>
    %29 = tpu.matmul %27, %28, %cst_12 {dimension_numbers = #tpu.dot_dimension_numbers<[1], [0], [0], [1], [0, 0, 1, 1], [], []>} : vector<8x8xbf16>, vector<8x8xbf16>, vector<8x8xf32> -> vector<8x8xf32>
    %30 = tpu.reciprocal %26 {approx = true} : vector<8x1xf32> -> vector<8x1xf32>
    %31 = vector.broadcast %30 : vector<8x1xf32> to vector<8x8xf32>
    %32 = arith.mulf %29, %31 : vector<8x8xf32>
    %c0_13 = arith.constant 0 : index
    %c0_14 = arith.constant 0 : index
    %c0_15 = arith.constant 0 : index
    %33 = vector.load %arg6[%c0_13, %c0_14, %c0_15] : memref<1x8x32xf32, #tpu.memory_space<vmem>>, vector<1x8x8xf32>
    %34 = vector.shape_cast %33 : vector<1x8x8xf32> to vector<8x8xf32>
    %35 = vector.shape_cast %32 : vector<8x8xf32> to vector<1x8x8xf32>
    tpu.vector_store %arg6[%c0_13, %c0_14, %c0_15], %35 {strides = array<i32>} : memref<1x8x32xf32, #tpu.memory_space<vmem>>, vector<1x8x8xf32>,
    %36 = vector.extract_strided_slice %9 {offsets = [0, 8], sizes = [8, 8], strides = [1, 1]} : vector<8x32xbf16> to vector<8x8xbf16>
    %37 = vector.extract_strided_slice %10 {offsets = [0, 8], sizes = [8, 8], strides = [1, 1]} : vector<8x32xbf16> to vector<8x8xbf16>
    %cst_16 = arith.constant dense<0.000000e+00> : vector<8x8xf32>
    %38 = tpu.matmul %36, %37, %cst_16 {dimension_numbers = #tpu.dot_dimension_numbers<[1], [1], [0], [0], [0, 0, 1, 0], [], []>} : vector<8x8xbf16>, vector<8x8xbf16>, vector<8x8xf32> -> vector<8x8xf32>
    %39 = arith.addf %38, %15 : vector<8x8xf32>
    %cst_17 = arith.constant dense<0xFF800000> : vector<8xf32>
    %40 = vector.multi_reduction <maximumf>, %39, %cst_17 [1] : vector<8x8xf32> to vector<8xf32>
    %41 = vector.shape_cast %40 : vector<8xf32> to vector<8x1xf32>
    %42 = vector.broadcast %41 : vector<8x1xf32> to vector<8x8xf32>
    %43 = arith.subf %39, %42 : vector<8x8xf32>
    %44 = math.exp %43 : vector<8x8xf32>
    %cst_18 = arith.constant dense<0.000000e+00> : vector<8xf32>
    %45 = vector.multi_reduction <add>, %44, %cst_18 [1] : vector<8x8xf32> to vector<8xf32>
    %46 = vector.shape_cast %45 : vector<8xf32> to vector<8x1xf32>
    %47 = arith.truncf %44 : vector<8x8xf32> to vector<8x8xbf16>
    %48 = vector.extract_strided_slice %11 {offsets = [0, 8], sizes = [8, 8], strides = [1, 1]} : vector<8x32xbf16> to vector<8x8xbf16>
    %cst_19 = arith.constant dense<0.000000e+00> : vector<8x8xf32>
    %49 = tpu.matmul %47, %48, %cst_19 {dimension_numbers = #tpu.dot_dimension_numbers<[1], [0], [0], [1], [0, 0, 1, 1], [], []>} : vector<8x8xbf16>, vector<8x8xbf16>, vector<8x8xf32> -> vector<8x8xf32>
    %50 = tpu.reciprocal %46 {approx = true} : vector<8x1xf32> -> vector<8x1xf32>
    %51 = vector.broadcast %50 : vector<8x1xf32> to vector<8x8xf32>
    %52 = arith.mulf %49, %51 : vector<8x8xf32>
    %c0_20 = arith.constant 0 : index
    %c0_21 = arith.constant 0 : index
    %c8 = arith.constant 8 : index
    %53 = vector.load %arg6[%c0_20, %c0_21, %c8] : memref<1x8x32xf32, #tpu.memory_space<vmem>>, vector<1x8x8xf32>
    %54 = vector.shape_cast %53 : vector<1x8x8xf32> to vector<8x8xf32>
    %55 = vector.shape_cast %52 : vector<8x8xf32> to vector<1x8x8xf32>
    tpu.vector_store %arg6[%c0_20, %c0_21, %c8], %55 {strides = array<i32>} : memref<1x8x32xf32, #tpu.memory_space<vmem>>, vector<1x8x8xf32>,
    %56 = vector.extract_strided_slice %9 {offsets = [0, 16], sizes = [8, 8], strides = [1, 1]} : vector<8x32xbf16> to vector<8x8xbf16>
    %57 = vector.extract_strided_slice %10 {offsets = [0, 16], sizes = [8, 8], strides = [1, 1]} : vector<8x32xbf16> to vector<8x8xbf16>
    %cst_22 = arith.constant dense<0.000000e+00> : vector<8x8xf32>
    %58 = tpu.matmul %56, %57, %cst_22 {dimension_numbers = #tpu.dot_dimension_numbers<[1], [1], [0], [0], [0, 0, 1, 0], [], []>} : vector<8x8xbf16>, vector<8x8xbf16>, vector<8x8xf32> -> vector<8x8xf32>
    %59 = arith.addf %58, %15 : vector<8x8xf32>
    %cst_23 = arith.constant dense<0xFF800000> : vector<8xf32>
    %60 = vector.multi_reduction <maximumf>, %59, %cst_23 [1] : vector<8x8xf32> to vector<8xf32>
    %61 = vector.shape_cast %60 : vector<8xf32> to vector<8x1xf32>
    %62 = vector.broadcast %61 : vector<8x1xf32> to vector<8x8xf32>
    %63 = arith.subf %59, %62 : vector<8x8xf32>
    %64 = math.exp %63 : vector<8x8xf32>
    %cst_24 = arith.constant dense<0.000000e+00> : vector<8xf32>
    %65 = vector.multi_reduction <add>, %64, %cst_24 [1] : vector<8x8xf32> to vector<8xf32>
    %66 = vector.shape_cast %65 : vector<8xf32> to vector<8x1xf32>
    %67 = arith.truncf %64 : vector<8x8xf32> to vector<8x8xbf16>
    %68 = vector.extract_strided_slice %11 {offsets = [0, 16], sizes = [8, 8], strides = [1, 1]} : vector<8x32xbf16> to vector<8x8xbf16>
    %cst_25 = arith.constant dense<0.000000e+00> : vector<8x8xf32>
    %69 = tpu.matmul %67, %68, %cst_25 {dimension_numbers = #tpu.dot_dimension_numbers<[1], [0], [0], [1], [0, 0, 1, 1], [], []>} : vector<8x8xbf16>, vector<8x8xbf16>, vector<8x8xf32> -> vector<8x8xf32>
    %70 = tpu.reciprocal %66 {approx = true} : vector<8x1xf32> -> vector<8x1xf32>
    %71 = vector.broadcast %70 : vector<8x1xf32> to vector<8x8xf32>
    %72 = arith.mulf %69, %71 : vector<8x8xf32>
    %c0_26 = arith.constant 0 : index
    %c0_27 = arith.constant 0 : index
    %c16 = arith.constant 16 : index
    %73 = vector.load %arg6[%c0_26, %c0_27, %c16] : memref<1x8x32xf32, #tpu.memory_space<vmem>>, vector<1x8x8xf32>
    %74 = vector.shape_cast %73 : vector<1x8x8xf32> to vector<8x8xf32>
    %75 = vector.shape_cast %72 : vector<8x8xf32> to vector<1x8x8xf32>
    tpu.vector_store %arg6[%c0_26, %c0_27, %c16], %75 {strides = array<i32>} : memref<1x8x32xf32, #tpu.memory_space<vmem>>, vector<1x8x8xf32>,
    %76 = vector.extract_strided_slice %9 {offsets = [0, 24], sizes = [8, 8], strides = [1, 1]} : vector<8x32xbf16> to vector<8x8xbf16>
    %77 = vector.extract_strided_slice %10 {offsets = [0, 24], sizes = [8, 8], strides = [1, 1]} : vector<8x32xbf16> to vector<8x8xbf16>
    %cst_28 = arith.constant dense<0.000000e+00> : vector<8x8xf32>
    %78 = tpu.matmul %76, %77, %cst_28 {dimension_numbers = #tpu.dot_dimension_numbers<[1], [1], [0], [0], [0, 0, 1, 0], [], []>} : vector<8x8xbf16>, vector<8x8xbf16>, vector<8x8xf32> -> vector<8x8xf32>
    %79 = arith.addf %78, %15 : vector<8x8xf32>
    %cst_29 = arith.constant dense<0xFF800000> : vector<8xf32>
    %80 = vector.multi_reduction <maximumf>, %79, %cst_29 [1] : vector<8x8xf32> to vector<8xf32>
    %81 = vector.shape_cast %80 : vector<8xf32> to vector<8x1xf32>
    %82 = vector.broadcast %81 : vector<8x1xf32> to vector<8x8xf32>
    %83 = arith.subf %79, %82 : vector<8x8xf32>
    %84 = math.exp %83 : vector<8x8xf32>
    %cst_30 = arith.constant dense<0.000000e+00> : vector<8xf32>
    %85 = vector.multi_reduction <add>, %84, %cst_30 [1] : vector<8x8xf32> to vector<8xf32>
    %86 = vector.shape_cast %85 : vector<8xf32> to vector<8x1xf32>
    %87 = arith.truncf %84 : vector<8x8xf32> to vector<8x8xbf16>
    %88 = vector.extract_strided_slice %11 {offsets = [0, 24], sizes = [8, 8], strides = [1, 1]} : vector<8x32xbf16> to vector<8x8xbf16>
    %cst_31 = arith.constant dense<0.000000e+00> : vector<8x8xf32>
    %89 = tpu.matmul %87, %88, %cst_31 {dimension_numbers = #tpu.dot_dimension_numbers<[1], [0], [0], [1], [0, 0, 1, 1], [], []>} : vector<8x8xbf16>, vector<8x8xbf16>, vector<8x8xf32> -> vector<8x8xf32>
    %90 = tpu.reciprocal %86 {approx = true} : vector<8x1xf32> -> vector<8x1xf32>
    %91 = vector.broadcast %90 : vector<8x1xf32> to vector<8x8xf32>
    %92 = arith.mulf %89, %91 : vector<8x8xf32>
    %c0_32 = arith.constant 0 : index
    %c0_33 = arith.constant 0 : index
    %c24 = arith.constant 24 : index
    %93 = vector.load %arg6[%c0_32, %c0_33, %c24] : memref<1x8x32xf32, #tpu.memory_space<vmem>>, vector<1x8x8xf32>
    %94 = vector.shape_cast %93 : vector<1x8x8xf32> to vector<8x8xf32>
    %95 = vector.shape_cast %92 : vector<8x8xf32> to vector<1x8x8xf32>
    tpu.vector_store %arg6[%c0_32, %c0_33, %c24], %95 {strides = array<i32>} : memref<1x8x32xf32, #tpu.memory_space<vmem>>, vector<1x8x8xf32>,
    return
  }
  func.func @transform_0(%arg0: i32, %arg1: i32) -> (i32, i32, i32) {
    %c0_i32 = arith.constant 0 : i32
    %c0_i32_0 = arith.constant 0 : i32
    %c0_i32_1 = arith.constant 0 : i32
    return %arg0, %c0_i32, %c0_i32_0 : i32, i32, i32
  }
  func.func @transform_1(%arg0: i32, %arg1: i32) -> (i32, i32) {
    %c0_i32 = arith.constant 0 : i32
    %c0_i32_0 = arith.constant 0 : i32
    return %c0_i32, %arg1 : i32, i32
  }
  func.func @transform_2(%arg0: i32, %arg1: i32) -> (i32, i32) {
    %c0_i32 = arith.constant 0 : i32
    %c0_i32_0 = arith.constant 0 : i32
    return %c0_i32, %arg1 : i32, i32
  }
  func.func @transform_3(%arg0: i32, %arg1: i32) -> (i32, i32, i32) {
    %c0_i32 = arith.constant 0 : i32
    %c0_i32_0 = arith.constant 0 : i32
    %c0_i32_1 = arith.constant 0 : i32
    return %arg0, %c0_i32, %c0_i32_0 : i32, i32, i32
  }
  func.func @transform_4(%arg0: i32, %arg1: i32) -> (i32, i32, i32) {
    %c0_i32 = arith.constant 0 : i32
    %c0_i32_0 = arith.constant 0 : i32
    return %arg0, %c0_i32, %arg1 : i32, i32, i32
  }
}

</mosaic_0001>

<llo_original>
// kernel: tpu_custom_call.1
$region0: #{tpu_custom_call.1}
  #allocation0 [shape = 'u32[]', space=smem, size = 0x4, offset = 0x4, fixed_abs, tag = 'smem constant byte address 0x4 - core index']
  #allocation1 [shape = 'u32[144,128]{1,0:T(1,128)}', space=vmem, size = 0x12000, scoped, tag = 'internal scratch']
  %s0 = inlined_call_operand.hbm [shape: f32[2,8,32], index: 0, kind: input, shape index: {}]
  %s1 = inlined_call_operand.hbm [shape: bf16[32,96], index: 1, kind: input, shape index: {}]
  %s2 = inlined_call_operand.vmem [shape: f32[1,96], index: 2, kind: input, shape index: {}]
  %s3 = inlined_call_operand.vmem [shape: f32[2,1,8], index: 3, kind: input, shape index: {}]
  %s4 = inlined_call_operand.hbm [shape: f32[2,8,32], index: 4, kind: output, shape index: {}]
  %s5 = sld [smem:[#allocation0]]
  $region57: #{tpu_custom_call.1} parent=0
    _
  %s7 = ssub.s32 1, %s5
  %s8 = scalar_select 0, %s7, %s5
  $region1: #{tpu_custom_call.1} parent=0
    #allocation2 [shape = 'u8[8192]{0}', space=vmem, size = 0x2000, scoped, tag = 'input window, operand 0']
    #allocation3 [shape = 's32[2]{0}', space=sflag, size = 0x8, scoped, tag = 'scoped memory for tpu_custom_call.1']
    #allocation4 [shape = 's32[2]{0}', space=sflag, size = 0x8, scoped, tag = 'scoped memory for tpu_custom_call.1']
    #allocation5 [shape = 'u8[8192]{0}', space=vmem, size = 0x2000, scoped, tag = 'input window, operand 1, single buffered']
    #allocation6 [shape = 's32[1]{0}', space=sflag, size = 0x4, scoped, tag = 'scoped memory for tpu_custom_call.1']
    #allocation7 [shape = 'u8[8192]{0}', space=vmem, size = 0x2000, scoped, tag = 'output window, operand 0']
    %9 = vsyncpa [#allocation3], 0
    %s10 = scalar_lea.sflag [#allocation3], 1
    %11 = vsyncpa %s10, 0
    %12 = vsyncpa [#allocation6], 0
    %13 = vsyncpa [#allocation4], 0
    %s14 = scalar_lea.sflag [#allocation4], 1
    %15 = vsyncpa %s14, 0
    loop: start=0, step=1, limit=4
    $region2: #{tpu_custom_call.1} parent=1 // loop_pre_header
      _
    $region3: #{tpu_custom_call.1} parent=1 // loop_header
      %s17 = sphi 0, %s21
      %p18 = scmp.ge.s32.totalorder %s17, 4
      %s24 = sphi 0, %s36
      %s25 = sphi 0, %s32
      %s26 = sphi 0, %s24
      %s27 = sphi 0, %s25
      %s28 = sphi 0, %s26
      %s29 = sphi 0, %s27
      %s39 = sphi 0, %s41
      %s42 = sphi 0, %s39
      %s43 = sphi 0, %s42
      %s59 = sphi 0, %s43
      %s65 = sphi 0, %s67
      %s68 = sphi 0, %s65
      %s69 = sphi 0, %s68
      %s85 = sphi 0, %s69
      %s91 = sphi 0, %s93
      %s94 = sphi 0, %s91
      %s95 = sphi 0, %s94
      %s111 = sphi 0, %s95
      %s117 = sphi 0, %s119
      %s120 = sphi 0, %s117
      %s121 = sphi 0, %s120
      %s137 = sphi 0, %s121
      %s145 = sphi 0, %s147
      %s148 = sphi 0, %s145
      %s149 = sphi 0, %s148
      %s165 = sphi 0, %s149
    $region4: #{tpu_custom_call.1} parent=1 // loop_header_branch
      %20 = sbr.rel (%p18) target = $region8
    $region5: #{tpu_custom_call.1} parent=1 // loop_body
      %s22 = ssub.s32 %s17, 1
      %s23 = ssub.s32 %s17, 2
      %s30 = sadd.s32 1, %s25
      %p31 = scmp.ge.s32.totalorder %s30, 1
      %s32 = scalar_select %p31, 0, %s30
      %s33 = sadd.s32 1, %s24
      %s34 = scalar_select %p31, %s33, %s24
      %p35 = scmp.ge.s32.totalorder %s34, 2
      %s36 = scalar_select %p35, 0, %s34
      %s37 = ssub.s32 %s24, %s36
      %p38 = scmp.eq.s32.totalorder %s37, 0
      %s40 = sadd.s32 %s39, 1
      %s41 = scalar_select %p38, %s39, %s40
      %p44 = pneg %p38
      %p45 = scmp.eq.s32.totalorder %s17, 1
      %p46 = por %p44, %p45
      %p47 = scmp.ne.s32.totalorder %s39, %s42
      %p48 = scmp.eq.s32.totalorder %s17, 0
      %p49 = por %p47, %p48
      %p50 = scmp.ne.s32.totalorder %s39, %s42
      %p51 = scmp.eq.s32.totalorder %s22, 1
      %p52 = por %p50, %p51
      %p53 = scmp.ne.s32.totalorder %s42, %s43
      %p54 = scmp.eq.s32.totalorder %s22, 0
      %p55 = por %p53, %p54
      %p56 = scmp.ne.s32.totalorder %s42, %s43
      %p57 = scmp.eq.s32.totalorder %s23, 1
      %p58 = por %p56, %p57
      %p60 = scmp.ne.s32.totalorder %s43, %s59
      %p61 = scmp.eq.s32.totalorder %s23, 0
      %p62 = por %p60, %p61
      %s63 = ssub.s32 %s25, %s32
      %p64 = scmp.eq.s32.totalorder %s63, 0
      %s66 = sadd.s32 %s65, 1
      %s67 = scalar_select %p64, %s65, %s66
      %p70 = pneg %p64
      %p71 = scmp.eq.s32.totalorder %s17, 1
      %p72 = por %p70, %p71
      %p73 = scmp.ne.s32.totalorder %s65, %s68
      %p74 = scmp.eq.s32.totalorder %s17, 0
      %p75 = por %p73, %p74
      %p76 = scmp.ne.s32.totalorder %s65, %s68
      %p77 = scmp.eq.s32.totalorder %s22, 1
      %p78 = por %p76, %p77
      %p79 = scmp.ne.s32.totalorder %s68, %s69
      %p80 = scmp.eq.s32.totalorder %s22, 0
      %p81 = por %p79, %p80
      %p82 = scmp.ne.s32.totalorder %s68, %s69
      %p83 = scmp.eq.s32.totalorder %s23, 1
      %p84 = por %p82, %p83
      %p86 = scmp.ne.s32.totalorder %s69, %s85
      %p87 = scmp.eq.s32.totalorder %s23, 0
      %p88 = por %p86, %p87
      %s89 = ssub.s32 %s25, %s32
      %p90 = scmp.eq.s32.totalorder %s89, 0
      %s92 = sadd.s32 %s91, 1
      %s93 = scalar_select %p90, %s91, %s92
      %p96 = pneg %p90
      %p97 = scmp.eq.s32.totalorder %s17, 1
      %p98 = por %p96, %p97
      %p99 = scmp.ne.s32.totalorder %s91, %s94
      %p100 = scmp.eq.s32.totalorder %s17, 0
      %p101 = por %p99, %p100
      %p102 = scmp.ne.s32.totalorder %s91, %s94
      %p103 = scmp.eq.s32.totalorder %s22, 1
      %p104 = por %p102, %p103
      %p105 = scmp.ne.s32.totalorder %s94, %s95
      %p106 = scmp.eq.s32.totalorder %s22, 0
      %p107 = por %p105, %p106
      %p108 = scmp.ne.s32.totalorder %s94, %s95
      %p109 = scmp.eq.s32.totalorder %s23, 1
      %p110 = por %p108, %p109
      %p112 = scmp.ne.s32.totalorder %s95, %s111
      %p113 = scmp.eq.s32.totalorder %s23, 0
      %p114 = por %p112, %p113
      %s115 = ssub.s32 %s24, %s36
      %p116 = scmp.eq.s32.totalorder %s115, 0
      %s118 = sadd.s32 %s117, 1
      %s119 = scalar_select %p116, %s117, %s118
      %p122 = pneg %p116
      %p123 = scmp.eq.s32.totalorder %s17, 1
      %p124 = por %p122, %p123
      %p125 = scmp.ne.s32.totalorder %s117, %s120
      %p126 = scmp.eq.s32.totalorder %s17, 0
      %p127 = por %p125, %p126
      %p128 = scmp.ne.s32.totalorder %s117, %s120
      %p129 = scmp.eq.s32.totalorder %s22, 1
      %p130 = por %p128, %p129
      %p131 = scmp.ne.s32.totalorder %s120, %s121
      %p132 = scmp.eq.s32.totalorder %s22, 0
      %p133 = por %p131, %p132
      %p134 = scmp.ne.s32.totalorder %s120, %s121
      %p135 = scmp.eq.s32.totalorder %s23, 1
      %p136 = por %p134, %p135
      %p138 = scmp.ne.s32.totalorder %s121, %s137
      %p139 = scmp.eq.s32.totalorder %s23, 0
      %p140 = por %p138, %p139
      %s141 = ssub.s32 %s24, %s36
      %s142 = ssub.s32 %s25, %s32
      %s143 = sor.u32 %s141, %s142
      %p144 = scmp.eq.s32.totalorder %s143, 0
      %s146 = sadd.s32 %s145, 1
      %s147 = scalar_select %p144, %s145, %s146
      %p150 = pneg %p144
      %p151 = scmp.eq.s32.totalorder %s17, 1
      %p152 = por %p150, %p151
      %p153 = scmp.ne.s32.totalorder %s145, %s148
      %p154 = scmp.eq.s32.totalorder %s17, 0
      %p155 = por %p153, %p154
      %p156 = scmp.ne.s32.totalorder %s145, %s148
      %p157 = scmp.eq.s32.totalorder %s22, 1
      %p158 = por %p156, %p157
      %p159 = scmp.ne.s32.totalorder %s148, %s149
      %p160 = scmp.eq.s32.totalorder %s22, 0
      %p161 = por %p159, %p160
      %p162 = scmp.ne.s32.totalorder %s148, %s149
      %p163 = scmp.eq.s32.totalorder %s23, 1
      %p164 = por %p162, %p163
      %p166 = scmp.ne.s32.totalorder %s149, %s165
      %p167 = scmp.eq.s32.totalorder %s23, 0
      %p168 = por %p166, %p167
      %p169 = scmp.le.s32.totalorder 1, %s17
      %p170 = scmp.lt.s32.totalorder %s17, 3
      %p171 = pnand %p169, %p170
      %p172 = pneg %p171
      // Predicated region
      $region9: #{tpu_custom_call.1} parent=5 // pred_check
        _
      $region10: #{tpu_custom_call.1} parent=5 // pred_check_branch
        %174 = sbr.rel (%p171) target = $region12
      $region11: #{tpu_custom_call.1} parent=5 // pred_region
        %s175 = ssub.s32 %s17, 1
        // Predicated region
        $region13: #{tpu_custom_call.1} parent=11 // pred_check
          %p176 = pneg %p81
        $region14: #{tpu_custom_call.1} parent=11 // pred_check_branch
          %178 = sbr.rel (%p176) target = $region16
        $region15: #{tpu_custom_call.1} parent=11 // pred_region
          %s180 = ssub.s32 256, 256
          %181 = vsyncadd [#allocation6], %s180
          %s182 = smul.addr %s27, 64
          %s183 = scalar_lea.hbm %s1, %s182
          %s184 = sshll.u32 [#allocation5], 4
          %s185 = int_to_ptr.vmem [resolvable:$true] %s184
          %190 = dma.hbm_to_vmem [thread:$0]  %s183, 256, %s185, [#allocation6], 64, 64, 4
        $region16: #{tpu_custom_call.1} parent=11 // pred_fallthru
          _
        // Predicated region
        $region17: #{tpu_custom_call.1} parent=11 // pred_check
          %p191 = pneg %p107
        $region18: #{tpu_custom_call.1} parent=11 // pred_check_branch
          %193 = sbr.rel (%p191) target = $region20
        $region19: #{tpu_custom_call.1} parent=11 // pred_region
          %p194 = scmp.lt.s32.totalorder %s27, 0
          %s195 = scalar_select %p194, %s27, 0
          %s196 = scalar_lea.vmem %s2, %s195
        $region20: #{tpu_custom_call.1} parent=11 // pred_fallthru
          _
      $region12: #{tpu_custom_call.1} parent=5 // pred_fallthru
        _
      %p197 = scmp.lt.s32.totalorder %s17, 2
      // Predicated region
      $region21: #{tpu_custom_call.1} parent=5 // pred_check
        %p198 = pneg %p197
      $region22: #{tpu_custom_call.1} parent=5 // pred_check_branch
        %200 = sbr.rel (%p198) target = $region24
      $region23: #{tpu_custom_call.1} parent=5 // pred_region
        // Predicated region
        $region25: #{tpu_custom_call.1} parent=23 // pred_check
          %p201 = pneg %p49
        $region26: #{tpu_custom_call.1} parent=23 // pred_check_branch
          %203 = sbr.rel (%p201) target = $region28
        $region27: #{tpu_custom_call.1} parent=23 // pred_region
          %s204 = sand.u32 %s39, 1
          %s205 = scalar_lea.sflag [#allocation3], %s204
          %s206 = sand.u32 %s39, 1
          %s207 = smul.addr %s206, 8
          %s208 = scalar_lea.vmem [#allocation2], %s207
          %s210 = ssub.s32 128, 128
          %211 = vsyncadd %s205, %s210
          %s212 = smul.addr %s24, 128
          %s213 = scalar_lea.hbm %s0, %s212
          %s215 = sshll.u32 %s208, 4
          %s216 = int_to_ptr.vmem [resolvable:$true] %s215
          %218 = dma.hbm_to_vmem [thread:$0]  %s213, 128, %s216, %s205
        $region28: #{tpu_custom_call.1} parent=23 // pred_fallthru
          _
        // Predicated region
        $region29: #{tpu_custom_call.1} parent=23 // pred_check
          %p219 = pneg %p127
        $region30: #{tpu_custom_call.1} parent=23 // pred_check_branch
          %221 = sbr.rel (%p219) target = $region32
        $region31: #{tpu_custom_call.1} parent=23 // pred_region
          %p222 = scmp.lt.s32.totalorder %s24, 1
          %s223 = scalar_select %p222, %s24, 1
          %s224 = scalar_lea.vmem %s3, %s223
        $region32: #{tpu_custom_call.1} parent=23 // pred_fallthru
          _
      $region24: #{tpu_custom_call.1} parent=5 // pred_fallthru
        _
      %p225 = scmp.le.s32.totalorder 1, %s17
      %p226 = scmp.lt.s32.totalorder %s17, 3
      %p227 = pnand %p225, %p226
      %p228 = pneg %p227
      // Predicated region
      $region33: #{tpu_custom_call.1} parent=5 // pred_check
        _
      $region34: #{tpu_custom_call.1} parent=5 // pred_check_branch
        %230 = sbr.rel (%p227) target = $region36
      $region35: #{tpu_custom_call.1} parent=5 // pred_region
        %s231 = ssub.s32 %s17, 1
        %s232 = sand.u32 %s42, 1
        %s233 = scalar_lea.sflag [#allocation3], %s232
        %s234 = sand.u32 %s42, 1
        %s235 = smul.addr %s234, 8
        %s236 = scalar_lea.vmem [#allocation2], %s235
        // Predicated region
        $region37: #{tpu_custom_call.1} parent=35 // pred_check
          %p237 = pneg %p55
        $region38: #{tpu_custom_call.1} parent=35 // pred_check_branch
          %239 = sbr.rel (%p237) target = $region40
        $region39: #{tpu_custom_call.1} parent=35 // pred_region
          %240 = dma.done %s233, 128
        $region40: #{tpu_custom_call.1} parent=35 // pred_fallthru
          _
        // Predicated region
        $region41: #{tpu_custom_call.1} parent=35 // pred_check
          %p241 = pneg %p81
        $region42: #{tpu_custom_call.1} parent=35 // pred_check_branch
          %243 = sbr.rel (%p241) target = $region44
        $region43: #{tpu_custom_call.1} parent=35 // pred_region
          %244 = dma.done [#allocation6], 256
        $region44: #{tpu_custom_call.1} parent=35 // pred_fallthru
          _
        %s245 = sand.u32 %s42, 1
        %s246 = scalar_lea.sflag [#allocation3], %s245
        %s247 = sand.u32 %s42, 1
        %s248 = smul.addr %s247, 8
        %s249 = scalar_lea.vmem [#allocation2], %s248
        %p250 = pneg %p55
        %p251 = pneg %p52
        %p252 = pneg %p81
        %p253 = pneg %p78
        %p254 = scmp.lt.s32.totalorder %s27, 0
        %s255 = scalar_select %p254, %s27, 0
        %s256 = scalar_lea.vmem %s2, %s255
        %p257 = pneg %p107
        %p258 = pneg %p104
        %p259 = scmp.lt.s32.totalorder %s26, 1
        %s260 = scalar_select %p259, %s26, 1
        %s261 = scalar_lea.vmem %s3, %s260
        %p262 = pneg %p133
        %p263 = pneg %p130
        %p264 = pneg %p161
        %p265 = pneg %p158
        %s266 = sand.u32 %s148, 1
        %s267 = scalar_lea.sflag [#allocation4], %s266
        %s268 = sand.u32 %s148, 1
        %s269 = smul.addr %s268, 8
        %s270 = scalar_lea.vmem [#allocation7], %s269
        %p271 = scmp.lt.s32.totalorder %s27, 0
        %s272 = scalar_select %p271, %s27, 0
        %s273 = scalar_lea.vmem %s2, %s272
        %p274 = scmp.lt.s32.totalorder %s26, 1
        %s275 = scalar_select %p274, %s26, 1
        %s276 = scalar_lea.vmem %s3, %s275
        %v278 = vld [vmem:[%s236] sm:$0xff]
        %v279 = vpack.c.bf16 %v278, %v278
        %v280 = vld [vmem:[#allocation5] sm:$0xf]
        %v281 = vld [vmem:[#allocation5 + $0x4] sm:$0xf]
        %v282 = vld [vmem:[#allocation5 + $0x8] sm:$0xf]
        %v283 = vld [vmem:[#allocation5 + $0xc] sm:$0xf]
        %v284 = vld [vmem:[%s273] sm:$0x1]
        %v286 = vlaneseq
        %v287 = vshrl.u32 %v286, 7
        %v288 = vsub.s32 0, %v287
        %v289 = vrot.slane %v284, %v288
        %v295 = vunpack.c.l.b16 %v280
        %v296 = vunpack.c.l.b16 %v281
        %v297 = vunpack.c.l.b16 %v282
        %v298 = vunpack.c.l.b16 %v283
        %v299 = vpack.c.b16 %v296, %v295
        %v300 = vpack.c.b16 %v298, %v297
        %vm303 = vcmask 261120
        %v305 = vsel %vm303, %v279, 0
        %307 = vmatprep.subr.bf16.mxu0 0
        %308 = vmatpush1.bf16.msra.mxu0 0
        %309 = vmatprep.subr.bf16.mxu0 0
        %310 = vmatpush1.bf16.msra.mxu0 0
        %311 = vmatprep.subr.bf16.mxu0 0
        %312 = vmatpush1.bf16.msra.mxu0 0
        %313 = vmatprep.subr.bf16.mxu0 0
        %314 = vmatpush1.bf16.msra.mxu0 0
        %315 = vmatprep.subr.bf16.mxu0 0
        %316 = vmatpush1.bf16.msra.mxu0 0
        %317 = vmatprep.subr.bf16.mxu0 0
        %318 = vmatpush1.bf16.msra.mxu0 0
        %319 = vmatprep.subr.bf16.mxu0 0
        %320 = vmatpush1.bf16.msra.mxu0 %v300
        %321 = vmatprep.subr.bf16.mxu0 0
        %322 = vmatpush1.bf16.msra.mxu0 %v299
        %323 = vmatprep.subr.bf16.mxu0 0
        %324 = vmatpush2.bf16.msra.mxu0 0
        %325 = vmatprep.subr.bf16.mxu0 0
        %326 = vmatpush2.bf16.msra.mxu0 0
        %327 = vmatprep.subr.bf16.mxu0 0
        %328 = vmatpush2.bf16.msra.mxu0 0
        %329 = vmatprep.subr.bf16.mxu0 0
        %330 = vmatpush2.bf16.msra.mxu0 0
        %331 = vmatprep.subr.bf16.mxu0 0
        %332 = vmatpush2.bf16.msra.mxu0 0
        %333 = vmatprep.subr.bf16.mxu0 0
        %334 = vmatpush2.bf16.msra.mxu0 0
        %335 = vmatprep.subr.bf16.mxu0 0
        %336 = vmatpush2.bf16.msra.mxu0 0
        %337 = vmatprep.subr.bf16.mxu0 0
        %338 = vmatpush2.bf16.msra.mxu0 0
        %339 = vmatprep.mubr.bf16.mxu0 0
        %340 = vmatmul.mubr.bf16.gmra.mxu0 %v305
        %v341 = vpop.f32.mrf.mxu0
        %v342 = vadd.f32 %v289, %v341
        %v343 = vpop.f32.mrf.mxu0
        %v344 = vpop.f32.mrf.mxu0
        %v345 = vpop.f32.mrf.mxu0
        %346 = vdwg.mxu0
        %v347 = vpack.c.bf16 %v342, %v342
        %v348 = vld [vmem:[%s276] sm:$0x1]
        %v350 = vlaneseq
        %v351 = vshrl.u32 %v350, 7
        %v352 = vsub.s32 0, %v351
        %v353 = vrot.slane %v348, %v352
        %356 = vrot.lane.b32.xlu0 %v347, 96
        %v357 = vpop.permute.xlu0 %356
        %vm358 = vcmask 64512
        %v360 = vsel %vm358, %v347, 0
        %v363 = vsel %vm358, %v357, 0
        %365 = vmatprep.subr.bf16.mxu0 0
        %366 = vmatpush1.bf16.xpose.msra.mxu0 0
        %367 = vmatprep.subr.bf16.mxu0 0
        %368 = vmatpush1.bf16.xpose.msra.mxu0 0
        %369 = vmatprep.subr.bf16.mxu0 0
        %370 = vmatpush1.bf16.xpose.msra.mxu0 0
        %371 = vmatprep.subr.bf16.mxu0 0
        %372 = vmatpush1.bf16.xpose.msra.mxu0 0
        %373 = vmatprep.subr.bf16.mxu0 0
        %374 = vmatpush1.bf16.xpose.msra.mxu0 0
        %375 = vmatprep.subr.bf16.mxu0 0
        %376 = vmatpush1.bf16.xpose.msra.mxu0 0
        %377 = vmatprep.subr.bf16.mxu0 0
        %378 = vmatpush1.bf16.xpose.msra.mxu0 0
        %379 = vmatprep.subr.bf16.mxu0 0
        %380 = vmatpush1.bf16.xpose.msra.mxu0 %v363
        %381 = vmatprep.subr.bf16.mxu0 0
        %382 = vmatpush2.bf16.xpose.msra.mxu0 0
        %383 = vmatprep.subr.bf16.mxu0 0
        %384 = vmatpush2.bf16.xpose.msra.mxu0 0
        %385 = vmatprep.subr.bf16.mxu0 0
        %386 = vmatpush2.bf16.xpose.msra.mxu0 0
        %387 = vmatprep.subr.bf16.mxu0 0
        %388 = vmatpush2.bf16.xpose.msra.mxu0 0
        %389 = vmatprep.subr.bf16.mxu0 0
        %390 = vmatpush2.bf16.xpose.msra.mxu0 0
        %391 = vmatprep.subr.bf16.mxu0 0
        %392 = vmatpush2.bf16.xpose.msra.mxu0 0
        %393 = vmatprep.subr.bf16.mxu0 0
        %394 = vmatpush2.bf16.xpose.msra.mxu0 0
        %395 = vmatprep.subr.bf16.mxu0 0
        %396 = vmatpush2.bf16.xpose.msra.mxu0 0
        %397 = vmatprep.mubr.bf16.mxu0 0
        %398 = vmatmul.mubr.bf16.gmra.mxu0 %v360
        %v399 = vpop.f32.mrf.mxu0
        %v400 = vadd.f32 %v353, %v399
        %v401 = vpop.f32.mrf.mxu0
        %v402 = vpop.f32.mrf.mxu0
        %v403 = vpop.f32.mrf.mxu0
        %404 = vdwg.mxu0
        %v405 = vsel %vm358, %v400, -inf
        %406 = vmax.xlane.f32.xlu0 %v405
        %v407 = vpop.xlane.xlu0 %406
        %v408 = vsub.f32 %v400, %v407
        %v409 = vmul.f32 %v408, 1.442695
        %v410 = vpow.pop %v409
        %v411 = vsel %vm358, %v410, 0.0
        %412 = vadd.xlane.f32.xlu0 %v411
        %v413 = vpop.xlane.xlu0 %412
        %v414 = vpack.c.bf16 %v410, %v410
        %415 = vrot.lane.b32.xlu0 %v347, 64
        %v416 = vpop.permute.xlu0 %415
        %v418 = vsel %vm358, %v414, 0
        %vm420 = vcmask 1043456
        %v422 = vsel %vm420, %v416, 0
        %424 = vmatprep.subr.bf16.mxu0 0
        %425 = vmatpush1.bf16.msra.mxu0 0
        %426 = vmatprep.subr.bf16.mxu0 0
        %427 = vmatpush1.bf16.msra.mxu0 0
        %428 = vmatprep.subr.bf16.mxu0 0
        %429 = vmatpush1.bf16.msra.mxu0 0
        %430 = vmatprep.subr.bf16.mxu0 0
        %431 = vmatpush1.bf16.msra.mxu0 0
        %432 = vmatprep.subr.bf16.mxu0 0
        %433 = vmatpush1.bf16.msra.mxu0 0
        %434 = vmatprep.subr.bf16.mxu0 0
        %435 = vmatpush1.bf16.msra.mxu0 0
        %436 = vmatprep.subr.bf16.mxu0 0
        %437 = vmatpush1.bf16.msra.mxu0 0
        %438 = vmatprep.subr.bf16.mxu0 0
        %439 = vmatpush1.bf16.msra.mxu0 %v422
        %440 = vmatprep.subr.bf16.mxu0 0
        %441 = vmatpush2.bf16.msra.mxu0 0
        %442 = vmatprep.subr.bf16.mxu0 0
        %443 = vmatpush2.bf16.msra.mxu0 0
        %444 = vmatprep.subr.bf16.mxu0 0
        %445 = vmatpush2.bf16.msra.mxu0 0
        %446 = vmatprep.subr.bf16.mxu0 0
        %447 = vmatpush2.bf16.msra.mxu0 0
        %448 = vmatprep.subr.bf16.mxu0 0
        %449 = vmatpush2.bf16.msra.mxu0 0
        %450 = vmatprep.subr.bf16.mxu0 0
        %451 = vmatpush2.bf16.msra.mxu0 0
        %452 = vmatprep.subr.bf16.mxu0 0
        %453 = vmatpush2.bf16.msra.mxu0 0
        %454 = vmatprep.subr.bf16.mxu0 0
        %455 = vmatpush2.bf16.msra.mxu0 0
        %456 = vmatprep.mubr.bf16.mxu0 0
        %457 = vmatmul.mubr.bf16.gmra.mxu0 %v418
        %v458 = vpop.f32.mrf.mxu0
        %v459 = vadd.f32 0.0, %v458
        %v460 = vpop.f32.mrf.mxu0
        %v461 = vpop.f32.mrf.mxu0
        %v462 = vpop.f32.mrf.mxu0
        %463 = vdwg.mxu0
        %v464 = vrcp.pop %v413
        %v465 = vmul.f32 %v459, %v464
        %466 = vst.msk [vmem:[%s270] sm:$0xff] %vm358, %v465
        %467 = vrot.lane.b32.xlu0 %v347, 120
        %v468 = vpop.permute.xlu0 %467
        %469 = vrot.lane.b32.xlu0 %v347, 88
        %v470 = vpop.permute.xlu0 %469
        %v472 = vsel %vm358, %v468, 0
        %v475 = vsel %vm358, %v470, 0
        %477 = vmatprep.subr.bf16.mxu0 0
        %478 = vmatpush1.bf16.xpose.msra.mxu0 0
        %479 = vmatprep.subr.bf16.mxu0 0
        %480 = vmatpush1.bf16.xpose.msra.mxu0 0
        %481 = vmatprep.subr.bf16.mxu0 0
        %482 = vmatpush1.bf16.xpose.msra.mxu0 0
        %483 = vmatprep.subr.bf16.mxu0 0
        %484 = vmatpush1.bf16.xpose.msra.mxu0 0
        %485 = vmatprep.subr.bf16.mxu0 0
        %486 = vmatpush1.bf16.xpose.msra.mxu0 0
        %487 = vmatprep.subr.bf16.mxu0 0
        %488 = vmatpush1.bf16.xpose.msra.mxu0 0
        %489 = vmatprep.subr.bf16.mxu0 0
        %490 = vmatpush1.bf16.xpose.msra.mxu0 0
        %491 = vmatprep.subr.bf16.mxu0 0
        %492 = vmatpush1.bf16.xpose.msra.mxu0 %v475
        %493 = vmatprep.subr.bf16.mxu0 0
        %494 = vmatpush2.bf16.xpose.msra.mxu0 0
        %495 = vmatprep.subr.bf16.mxu0 0
        %496 = vmatpush2.bf16.xpose.msra.mxu0 0
        %497 = vmatprep.subr.bf16.mxu0 0
        %498 = vmatpush2.bf16.xpose.msra.mxu0 0
        %499 = vmatprep.subr.bf16.mxu0 0
        %500 = vmatpush2.bf16.xpose.msra.mxu0 0
        %501 = vmatprep.subr.bf16.mxu0 0
        %502 = vmatpush2.bf16.xpose.msra.mxu0 0
        %503 = vmatprep.subr.bf16.mxu0 0
        %504 = vmatpush2.bf16.xpose.msra.mxu0 0
        %505 = vmatprep.subr.bf16.mxu0 0
        %506 = vmatpush2.bf16.xpose.msra.mxu0 0
        %507 = vmatprep.subr.bf16.mxu0 0
        %508 = vmatpush2.bf16.xpose.msra.mxu0 0
        %509 = vmatprep.mubr.bf16.mxu0 0
        %510 = vmatmul.mubr.bf16.gmra.mxu0 %v472
        %v511 = vpop.f32.mrf.mxu0
        %v512 = vadd.f32 %v353, %v511
        %v513 = vpop.f32.mrf.mxu0
        %v514 = vpop.f32.mrf.mxu0
        %v515 = vpop.f32.mrf.mxu0
        %516 = vdwg.mxu0
        %v517 = vsel %vm358, %v512, -inf
        %518 = vmax.xlane.f32.xlu0 %v517
        %v519 = vpop.xlane.xlu0 %518
        %v520 = vsub.f32 %v512, %v519
        %v521 = vmul.f32 %v520, 1.442695
        %v522 = vpow.pop %v521
        %v523 = vsel %vm358, %v522, 0.0
        %524 = vadd.xlane.f32.xlu0 %v523
        %v525 = vpop.xlane.xlu0 %524
        %v526 = vpack.c.bf16 %v522, %v522
        %527 = vrot.lane.b32.xlu0 %v347, 56
        %v528 = vpop.permute.xlu0 %527
        %v530 = vsel %vm358, %v526, 0
        %v533 = vsel %vm420, %v528, 0
        %535 = vmatprep.subr.bf16.mxu0 0
        %536 = vmatpush1.bf16.msra.mxu0 0
        %537 = vmatprep.subr.bf16.mxu0 0
        %538 = vmatpush1.bf16.msra.mxu0 0
        %539 = vmatprep.subr.bf16.mxu0 0
        %540 = vmatpush1.bf16.msra.mxu0 0
        %541 = vmatprep.subr.bf16.mxu0 0
        %542 = vmatpush1.bf16.msra.mxu0 0
        %543 = vmatprep.subr.bf16.mxu0 0
        %544 = vmatpush1.bf16.msra.mxu0 0
        %545 = vmatprep.subr.bf16.mxu0 0
        %546 = vmatpush1.bf16.msra.mxu0 0
        %547 = vmatprep.subr.bf16.mxu0 0
        %548 = vmatpush1.bf16.msra.mxu0 0
        %549 = vmatprep.subr.bf16.mxu0 0
        %550 = vmatpush1.bf16.msra.mxu0 %v533
        %551 = vmatprep.subr.bf16.mxu0 0
        %552 = vmatpush2.bf16.msra.mxu0 0
        %553 = vmatprep.subr.bf16.mxu0 0
        %554 = vmatpush2.bf16.msra.mxu0 0
        %555 = vmatprep.subr.bf16.mxu0 0
        %556 = vmatpush2.bf16.msra.mxu0 0
        %557 = vmatprep.subr.bf16.mxu0 0
        %558 = vmatpush2.bf16.msra.mxu0 0
        %559 = vmatprep.subr.bf16.mxu0 0
        %560 = vmatpush2.bf16.msra.mxu0 0
        %561 = vmatprep.subr.bf16.mxu0 0
        %562 = vmatpush2.bf16.msra.mxu0 0
        %563 = vmatprep.subr.bf16.mxu0 0
        %564 = vmatpush2.bf16.msra.mxu0 0
        %565 = vmatprep.subr.bf16.mxu0 0
        %566 = vmatpush2.bf16.msra.mxu0 0
        %567 = vmatprep.mubr.bf16.mxu0 0
        %568 = vmatmul.mubr.bf16.gmra.mxu0 %v530
        %v569 = vpop.f32.mrf.mxu0
        %v570 = vadd.f32 0.0, %v569
        %v571 = vpop.f32.mrf.mxu0
        %v572 = vpop.f32.mrf.mxu0
        %v573 = vpop.f32.mrf.mxu0
        %574 = vdwg.mxu0
        %v575 = vrcp.pop %v525
        %v576 = vmul.f32 %v570, %v575
        %578 = vrot.lane.b32.xlu0 %v576, 8
        %v579 = vpop.permute.xlu0 %578
        %vm581 = vcmask 130112
        %582 = vst.msk [vmem:[%s270] sm:$0xff] %vm581, %v579
        %583 = vrot.lane.b32.xlu0 %v347, 112
        %v584 = vpop.permute.xlu0 %583
        %585 = vrot.lane.b32.xlu0 %v347, 80
        %v586 = vpop.permute.xlu0 %585
        %v588 = vsel %vm358, %v584, 0
        %v591 = vsel %vm358, %v586, 0
        %593 = vmatprep.subr.bf16.mxu0 0
        %594 = vmatpush1.bf16.xpose.msra.mxu0 0
        %595 = vmatprep.subr.bf16.mxu0 0
        %596 = vmatpush1.bf16.xpose.msra.mxu0 0
        %597 = vmatprep.subr.bf16.mxu0 0
        %598 = vmatpush1.bf16.xpose.msra.mxu0 0
        %599 = vmatprep.subr.bf16.mxu0 0
        %600 = vmatpush1.bf16.xpose.msra.mxu0 0
        %601 = vmatprep.subr.bf16.mxu0 0
        %602 = vmatpush1.bf16.xpose.msra.mxu0 0
        %603 = vmatprep.subr.bf16.mxu0 0
        %604 = vmatpush1.bf16.xpose.msra.mxu0 0
        %605 = vmatprep.subr.bf16.mxu0 0
        %606 = vmatpush1.bf16.xpose.msra.mxu0 0
        %607 = vmatprep.subr.bf16.mxu0 0
        %608 = vmatpush1.bf16.xpose.msra.mxu0 %v591
        %609 = vmatprep.subr.bf16.mxu0 0
        %610 = vmatpush2.bf16.xpose.msra.mxu0 0
        %611 = vmatprep.subr.bf16.mxu0 0
        %612 = vmatpush2.bf16.xpose.msra.mxu0 0
        %613 = vmatprep.subr.bf16.mxu0 0
        %614 = vmatpush2.bf16.xpose.msra.mxu0 0
        %615 = vmatprep.subr.bf16.mxu0 0
        %616 = vmatpush2.bf16.xpose.msra.mxu0 0
        %617 = vmatprep.subr.bf16.mxu0 0
        %618 = vmatpush2.bf16.xpose.msra.mxu0 0
        %619 = vmatprep.subr.bf16.mxu0 0
        %620 = vmatpush2.bf16.xpose.msra.mxu0 0
        %621 = vmatprep.subr.bf16.mxu0 0
        %622 = vmatpush2.bf16.xpose.msra.mxu0 0
        %623 = vmatprep.subr.bf16.mxu0 0
        %624 = vmatpush2.bf16.xpose.msra.mxu0 0
        %625 = vmatprep.mubr.bf16.mxu0 0
        %626 = vmatmul.mubr.bf16.gmra.mxu0 %v588
        %v627 = vpop.f32.mrf.mxu0
        %v628 = vadd.f32 %v353, %v627
        %v629 = vpop.f32.mrf.mxu0
        %v630 = vpop.f32.mrf.mxu0
        %v631 = vpop.f32.mrf.mxu0
        %632 = vdwg.mxu0
        %v633 = vsel %vm358, %v628, -inf
        %634 = vmax.xlane.f32.xlu0 %v633
        %v635 = vpop.xlane.xlu0 %634
        %v636 = vsub.f32 %v628, %v635
        %v637 = vmul.f32 %v636, 1.442695
        %v638 = vpow.pop %v637
        %v639 = vsel %vm358, %v638, 0.0
        %640 = vadd.xlane.f32.xlu0 %v639
        %v641 = vpop.xlane.xlu0 %640
        %v642 = vpack.c.bf16 %v638, %v638
        %643 = vrot.lane.b32.xlu0 %v347, 48
        %v644 = vpop.permute.xlu0 %643
        %v646 = vsel %vm358, %v642, 0
        %v649 = vsel %vm420, %v644, 0
        %651 = vmatprep.subr.bf16.mxu0 0
        %652 = vmatpush1.bf16.msra.mxu0 0
        %653 = vmatprep.subr.bf16.mxu0 0
        %654 = vmatpush1.bf16.msra.mxu0 0
        %655 = vmatprep.subr.bf16.mxu0 0
        %656 = vmatpush1.bf16.msra.mxu0 0
        %657 = vmatprep.subr.bf16.mxu0 0
        %658 = vmatpush1.bf16.msra.mxu0 0
        %659 = vmatprep.subr.bf16.mxu0 0
        %660 = vmatpush1.bf16.msra.mxu0 0
        %661 = vmatprep.subr.bf16.mxu0 0
        %662 = vmatpush1.bf16.msra.mxu0 0
        %663 = vmatprep.subr.bf16.mxu0 0
        %664 = vmatpush1.bf16.msra.mxu0 0
        %665 = vmatprep.subr.bf16.mxu0 0
        %666 = vmatpush1.bf16.msra.mxu0 %v649
        %667 = vmatprep.subr.bf16.mxu0 0
        %668 = vmatpush2.bf16.msra.mxu0 0
        %669 = vmatprep.subr.bf16.mxu0 0
        %670 = vmatpush2.bf16.msra.mxu0 0
        %671 = vmatprep.subr.bf16.mxu0 0
        %672 = vmatpush2.bf16.msra.mxu0 0
        %673 = vmatprep.subr.bf16.mxu0 0
        %674 = vmatpush2.bf16.msra.mxu0 0
        %675 = vmatprep.subr.bf16.mxu0 0
        %676 = vmatpush2.bf16.msra.mxu0 0
        %677 = vmatprep.subr.bf16.mxu0 0
        %678 = vmatpush2.bf16.msra.mxu0 0
        %679 = vmatprep.subr.bf16.mxu0 0
        %680 = vmatpush2.bf16.msra.mxu0 0
        %681 = vmatprep.subr.bf16.mxu0 0
        %682 = vmatpush2.bf16.msra.mxu0 0
        %683 = vmatprep.mubr.bf16.mxu0 0
        %684 = vmatmul.mubr.bf16.gmra.mxu0 %v646
        %v685 = vpop.f32.mrf.mxu0
        %v686 = vadd.f32 0.0, %v685
        %v687 = vpop.f32.mrf.mxu0
        %v688 = vpop.f32.mrf.mxu0
        %v689 = vpop.f32.mrf.mxu0
        %690 = vdwg.mxu0
        %v691 = vrcp.pop %v641
        %v692 = vmul.f32 %v686, %v691
        %694 = vrot.lane.b32.xlu0 %v692, 16
        %v695 = vpop.permute.xlu0 %694
        %vm697 = vcmask 195712
        %698 = vst.msk [vmem:[%s270] sm:$0xff] %vm697, %v695
        %699 = vrot.lane.b32.xlu0 %v347, 104
        %v700 = vpop.permute.xlu0 %699
        %701 = vrot.lane.b32.xlu0 %v347, 72
        %v702 = vpop.permute.xlu0 %701
        %v704 = vsel %vm358, %v700, 0
        %v707 = vsel %vm358, %v702, 0
        %709 = vmatprep.subr.bf16.mxu0 0
        %710 = vmatpush1.bf16.xpose.msra.mxu0 0
        %711 = vmatprep.subr.bf16.mxu0 0
        %712 = vmatpush1.bf16.xpose.msra.mxu0 0
        %713 = vmatprep.subr.bf16.mxu0 0
        %714 = vmatpush1.bf16.xpose.msra.mxu0 0
        %715 = vmatprep.subr.bf16.mxu0 0
        %716 = vmatpush1.bf16.xpose.msra.mxu0 0
        %717 = vmatprep.subr.bf16.mxu0 0
        %718 = vmatpush1.bf16.xpose.msra.mxu0 0
        %719 = vmatprep.subr.bf16.mxu0 0
        %720 = vmatpush1.bf16.xpose.msra.mxu0 0
        %721 = vmatprep.subr.bf16.mxu0 0
        %722 = vmatpush1.bf16.xpose.msra.mxu0 0
        %723 = vmatprep.subr.bf16.mxu0 0
        %724 = vmatpush1.bf16.xpose.msra.mxu0 %v707
        %725 = vmatprep.subr.bf16.mxu0 0
        %726 = vmatpush2.bf16.xpose.msra.mxu0 0
        %727 = vmatprep.subr.bf16.mxu0 0
        %728 = vmatpush2.bf16.xpose.msra.mxu0 0
        %729 = vmatprep.subr.bf16.mxu0 0
        %730 = vmatpush2.bf16.xpose.msra.mxu0 0
        %731 = vmatprep.subr.bf16.mxu0 0
        %732 = vmatpush2.bf16.xpose.msra.mxu0 0
        %733 = vmatprep.subr.bf16.mxu0 0
        %734 = vmatpush2.bf16.xpose.msra.mxu0 0
        %735 = vmatprep.subr.bf16.mxu0 0
        %736 = vmatpush2.bf16.xpose.msra.mxu0 0
        %737 = vmatprep.subr.bf16.mxu0 0
        %738 = vmatpush2.bf16.xpose.msra.mxu0 0
        %739 = vmatprep.subr.bf16.mxu0 0
        %740 = vmatpush2.bf16.xpose.msra.mxu0 0
        %741 = vmatprep.mubr.bf16.mxu0 0
        %742 = vmatmul.mubr.bf16.gmra.mxu0 %v704
        %v743 = vpop.f32.mrf.mxu0
        %v744 = vadd.f32 %v353, %v743
        %v745 = vpop.f32.mrf.mxu0
        %v746 = vpop.f32.mrf.mxu0
        %v747 = vpop.f32.mrf.mxu0
        %748 = vdwg.mxu0
        %v749 = vsel %vm358, %v744, -inf
        %750 = vmax.xlane.f32.xlu0 %v749
        %v751 = vpop.xlane.xlu0 %750
        %v752 = vsub.f32 %v744, %v751
        %v753 = vmul.f32 %v752, 1.442695
        %v754 = vpow.pop %v753
        %v755 = vsel %vm358, %v754, 0.0
        %756 = vadd.xlane.f32.xlu0 %v755
        %v757 = vpop.xlane.xlu0 %756
        %v758 = vpack.c.bf16 %v754, %v754
        %759 = vrot.lane.b32.xlu0 %v347, 40
        %v760 = vpop.permute.xlu0 %759
        %v762 = vsel %vm358, %v758, 0
        %v765 = vsel %vm420, %v760, 0
        %767 = vmatprep.subr.bf16.mxu0 0
        %768 = vmatpush1.bf16.msra.mxu0 0
        %769 = vmatprep.subr.bf16.mxu0 0
        %770 = vmatpush1.bf16.msra.mxu0 0
        %771 = vmatprep.subr.bf16.mxu0 0
        %772 = vmatpush1.bf16.msra.mxu0 0
        %773 = vmatprep.subr.bf16.mxu0 0
        %774 = vmatpush1.bf16.msra.mxu0 0
        %775 = vmatprep.subr.bf16.mxu0 0
        %776 = vmatpush1.bf16.msra.mxu0 0
        %777 = vmatprep.subr.bf16.mxu0 0
        %778 = vmatpush1.bf16.msra.mxu0 0
        %779 = vmatprep.subr.bf16.mxu0 0
        %780 = vmatpush1.bf16.msra.mxu0 0
        %781 = vmatprep.subr.bf16.mxu0 0
        %782 = vmatpush1.bf16.msra.mxu0 %v765
        %783 = vmatprep.subr.bf16.mxu0 0
        %784 = vmatpush2.bf16.msra.mxu0 0
        %785 = vmatprep.subr.bf16.mxu0 0
        %786 = vmatpush2.bf16.msra.mxu0 0
        %787 = vmatprep.subr.bf16.mxu0 0
        %788 = vmatpush2.bf16.msra.mxu0 0
        %789 = vmatprep.subr.bf16.mxu0 0
        %790 = vmatpush2.bf16.msra.mxu0 0
        %791 = vmatprep.subr.bf16.mxu0 0
        %792 = vmatpush2.bf16.msra.mxu0 0
        %793 = vmatprep.subr.bf16.mxu0 0
        %794 = vmatpush2.bf16.msra.mxu0 0
        %795 = vmatprep.subr.bf16.mxu0 0
        %796 = vmatpush2.bf16.msra.mxu0 0
        %797 = vmatprep.subr.bf16.mxu0 0
        %798 = vmatpush2.bf16.msra.mxu0 0
        %799 = vmatprep.mubr.bf16.mxu0 0
        %800 = vmatmul.mubr.bf16.gmra.mxu0 %v762
        %v801 = vpop.f32.mrf.mxu0
        %v802 = vadd.f32 0.0, %v801
        %v803 = vpop.f32.mrf.mxu0
        %v804 = vpop.f32.mrf.mxu0
        %v805 = vpop.f32.mrf.mxu0
        %806 = vdwg.mxu0
        %v807 = vrcp.pop %v757
        %v808 = vmul.f32 %v802, %v807
        %810 = vrot.lane.b32.xlu0 %v808, 24
        %v811 = vpop.permute.xlu0 %810
        %vm813 = vcmask 261312
        %814 = vst.msk [vmem:[%s270] sm:$0xff] %vm813, %v811
        %s815 = sand.u32 %s148, 1
        %s816 = scalar_lea.sflag [#allocation4], %s815
        %s817 = sand.u32 %s148, 1
        %s818 = smul.addr %s817, 8
        %s819 = scalar_lea.vmem [#allocation7], %s818
        // Predicated region
        $region45: #{tpu_custom_call.1} parent=35 // pred_check
          %p820 = pneg %p158
        $region46: #{tpu_custom_call.1} parent=35 // pred_check_branch
          %822 = sbr.rel (%p820) target = $region48
        $region47: #{tpu_custom_call.1} parent=35 // pred_region
          %s824 = ssub.s32 128, 128
          %825 = vsyncadd %s816, %s824
          %s826 = sadd.s32 %s27, %s26
          %s827 = smul.addr %s826, 128
          %s828 = scalar_lea.hbm %s4, %s827
          %s830 = sshll.u32 %s819, 4
          %s831 = int_to_ptr.vmem [resolvable:$true] %s830
          %833 = dma.vmem_to_hbm [thread:$0]  %s831, 128, %s828, %s816
        $region48: #{tpu_custom_call.1} parent=35 // pred_fallthru
          _
      $region36: #{tpu_custom_call.1} parent=5 // pred_fallthru
        _
      %p834 = scmp.le.s32.totalorder 2, %s17
      // Predicated region
      $region49: #{tpu_custom_call.1} parent=5 // pred_check
        %p835 = pneg %p834
      $region50: #{tpu_custom_call.1} parent=5 // pred_check_branch
        %837 = sbr.rel (%p835) target = $region52
      $region51: #{tpu_custom_call.1} parent=5 // pred_region
        %s838 = ssub.s32 %s17, 2
        // Predicated region
        $region53: #{tpu_custom_call.1} parent=51 // pred_check
          %p839 = pneg %p164
        $region54: #{tpu_custom_call.1} parent=51 // pred_check_branch
          %841 = sbr.rel (%p839) target = $region56
        $region55: #{tpu_custom_call.1} parent=51 // pred_region
          %s842 = sand.u32 %s149, 1
          %s843 = scalar_lea.sflag [#allocation4], %s842
          %s844 = sand.u32 %s149, 1
          %s845 = smul.addr %s844, 8
          %s846 = scalar_lea.vmem [#allocation7], %s845
          %847 = dma.done %s843, 128
        $region56: #{tpu_custom_call.1} parent=51 // pred_fallthru
          _
      $region52: #{tpu_custom_call.1} parent=5 // pred_fallthru
        _
    $region6: #{tpu_custom_call.1} parent=1 // loop_footer
      %s21 = sadd.s32 1, %s17
    $region7: #{tpu_custom_call.1} parent=1 // loop_footer_branch
      %16 = sbr.rel target = $region3
    $region8: #{tpu_custom_call.1} parent=1 // loop_exit
      _
    %848 = vsyncpa [#allocation3], 1
    %s849 = scalar_lea.sflag [#allocation3], 1
    %850 = vsyncpa %s849, 1
    %851 = vsyncpa [#allocation6], 1
    %852 = vsyncpa [#allocation4], 1
    %s853 = scalar_lea.sflag [#allocation4], 1
    %854 = vsyncpa %s853, 1

</llo_original>
